<compile_context>
chip_gen: v7x
topology: tpu7x:2x2x1
jax: 0.10.0
libtpu: 0.0.40
codegen_flags: <defaults>
</compile_context>

<pallas_src>
import jax
import jax.numpy as jnp
from jax.experimental import pallas as pl
from jax.experimental.pallas import tpu as pltpu


def _round_up(x, m):
    return (x + m - 1) // m * m


def _pick_tile(n):
    """Lane-tile (multiple of 128).  One step for small N, >=2 balanced steps
    (cap 4096) for large N so v7x megacore sharding has work."""
    if n <= 1024:
        return _round_up(max(n, 1), 128)
    return min(4096, max(256, _round_up((n + 1) // 2, 128)))


def _critic_kernel(xT_ref, w1_ref, w2_ref, bvec_ref, b3_ref, o_ref):
    # xT  : (D, T)  samples on the lane axis (pre-cast to matmul dtype)
    # w1  : (H, D)  w2: (H, H)   (pre-cast to matmul dtype, VMEM-resident)
    # bvec: (H, 3)  f32, columns = [b1 | b2 | w3]
    # b3  : (1, 1)  f32 scalar in SMEM
    # o   : (1, T)  f32
    h1 = jnp.dot(w1_ref[...], xT_ref[...], preferred_element_type=jnp.float32)
    h1 = jnp.maximum(h1 + bvec_ref[:, 0:1], 0.0)                       # (H, T) f32

    h2 = jnp.dot(w2_ref[...], h1.astype(w2_ref.dtype),
                 preferred_element_type=jnp.float32)
    h2 = jnp.maximum(h2 + bvec_ref[:, 1:2], 0.0)                       # (H, T) f32

    # Final (H -> 1) layer as VPU multiply + sublane reduction: lane-dense (1, T) row.
    q = jnp.sum(h2 * bvec_ref[:, 2:3], axis=0, keepdims=True) + b3_ref[0, 0]
    o_ref[...] = q.astype(o_ref.dtype)


def vanilla_critic_forward(obs_t, params, n_agents, precision=None):
    """obs_t: [bs, 1, n_agents, obs_dim] (the t-sliced obs, max_t == 1).

    precision: "f32" (near-exact), "bf16" (halved weight/activation DMA),
    or None -> auto ("bf16" only once N is large enough that DMA matters).
    """
    bs = obs_t.shape[0]
    # _build_inputs (non-central-V path, t given):
    inputs = obs_t.reshape(bs, 1, -1).reshape(bs * n_agents, -1)       # (N, D)
    N, D = inputs.shape
    w1, b1, w2, b2, w3, b3 = params                                    # PyTorch layout: W (out, in)
    H = w1.shape[0]

    if precision is None:
        precision = "bf16" if N >= 1024 else "f32"
    mm_dtype = jnp.bfloat16 if precision == "bf16" else jnp.float32
    itemsize = jnp.dtype(mm_dtype).itemsize

    tile = _pick_tile(N)
    n_blocks = (N + tile - 1) // tile
    n_pad = n_blocks * tile

    # Fold pad + transpose + cast into one expression -> single XLA fusion /
    # materialization pass for the activation slab (no separate pad round trip).
    x_t = jnp.pad(inputs, ((0, n_pad - N), (0, 0))).T.astype(mm_dtype)  # (D, n_pad)

    # Pre-cast weights (bf16 path halves the W1/W2 DMA and removes in-kernel casts).
    w1c = w1.astype(mm_dtype)                                           # (H, D)
    w2c = w2.astype(mm_dtype)                                           # (H, H)
    # Pack the three tiny per-feature vectors into a single (H, 3) f32 input.
    bvec = jnp.stack([b1, b2, w3.reshape(-1)], axis=1).astype(jnp.float32)
    b3s = b3.reshape(1, 1).astype(jnp.float32)

    flops = 2 * N * (D * H + H * H + H)
    bytes_accessed = itemsize * (N * D + H * D + H * H) + 4 * (3 * H + 1 + n_pad)

    q_row = pl.pallas_call(
        _critic_kernel,
        out_shape=jax.ShapeDtypeStruct((1, n_pad), jnp.float32),
        grid=(n_blocks,),
        in_specs=[
            pl.BlockSpec((D, tile), lambda i: (0, i)),          # activation tile (pipelined)
            pl.BlockSpec((H, D), lambda i: (0, 0)),             # W1  (VMEM-resident)
            pl.BlockSpec((H, H), lambda i: (0, 0)),             # W2  (VMEM-resident)
            pl.BlockSpec((H, 3), lambda i: (0, 0)),             # [b1 | b2 | w3] packed
            pl.BlockSpec(memory_space=pltpu.MemorySpace.SMEM),  # b3 scalar
        ],
        out_specs=pl.BlockSpec((1, tile), lambda i: (0, i)),
        compiler_params=pltpu.CompilerParams(
            dimension_semantics=("parallel",),
            vmem_limit_bytes=32 * 1024 * 1024),
        cost_estimate=pl.CostEstimate(
            flops=flops, transcendentals=0, bytes_accessed=bytes_accessed),
    )(x_t, w1c, w2c, bvec, b3s)

    # q.view(bs, n_agents, -1)
    return q_row[0, :N].reshape(bs, n_agents, 1)


def init_params(key, input_shape, hidden=128):
    """Deterministic init mimicking nn.Linear default (uniform +/- 1/sqrt(fan_in)).
    Weights stored in PyTorch layout: W (out, in), b (out,)."""
    ks = jax.random.split(key, 6)

    def linear(kw, kb, fan_in, fan_out):
        bound = 1.0 / (fan_in ** 0.5)
        w = jax.random.uniform(kw, (fan_out, fan_in), jnp.float32, -bound, bound)
        b = jax.random.uniform(kb, (fan_out,), jnp.float32, -bound, bound)
        return w, b

    w1, b1 = linear(ks[0], ks[1], input_shape, hidden)
    w2, b2 = linear(ks[2], ks[3], hidden, hidden)
    w3, b3 = linear(ks[4], ks[5], hidden, 1)
    return (w1, b1, w2, b2, w3, b3)


def reference_forward(obs_t, params, n_agents):
    bs = obs_t.shape[0]
    inputs = obs_t.reshape(bs, 1, -1).reshape(bs * n_agents, -1)
    w1, b1, w2, b2, w3, b3 = params
    hi = jax.lax.Precision.HIGHEST
    x = jnp.maximum(jnp.dot(inputs, w1.T, precision=hi) + b1, 0.0)
    x = jnp.maximum(jnp.dot(x, w2.T, precision=hi) + b2, 0.0)
    q = jnp.dot(x, w3.T, precision=hi) + b3
    return q.reshape(bs, n_agents, -1)


if __name__ == "__main__":
    # Small shapes: bs=2, n_agents=4, obs_dim=32, hidden=128 (as in the module).
    bs, n_agents, obs_dim, hidden = 2, 4, 32, 128
    key = jax.random.PRNGKey(0)
    k_obs, k_param = jax.random.split(key)

    # batch['obs'][:, t:t+1] for t=0 -> [bs, 1, n_agents, obs_dim]
    obs_t = jax.random.normal(k_obs, (bs, 1, n_agents, obs_dim), jnp.float32)
    params = init_params(k_param, obs_dim, hidden)

    # TODO(synk): obs_rms normalization (is_observation_normalized) is stateful
    # running statistics; omitted (module default path is_obs_normalized=False).

    fwd = jax.jit(vanilla_critic_forward, static_argnums=(2, 3))
    q_ref = reference_forward(obs_t, params, n_agents)

    # f32 path (auto-selected at this tiny N): near-exact vs f32 reference.
    q = jax.block_until_ready(fwd(obs_t, params, n_agents, "f32"))
    assert q.shape == (bs, n_agents, 1), q.shape
    assert jnp.allclose(q, q_ref, atol=1e-2, rtol=1e-2), "f32 path mismatch vs reference"

    # bf16 pre-cast path (what large-N workloads select): looser tolerance.
    q16 = jax.block_until_ready(fwd(obs_t, params, n_agents, "bf16"))
    assert q16.shape == (bs, n_agents, 1), q16.shape
    assert jnp.allclose(q16, q_ref, atol=5e-2, rtol=5e-2), "bf16 path mismatch vs reference"

    print("KERNEL_OK")
</pallas_src>

<mosaic_0001>
module attributes {stable_mosaic.version = 11 : i64} {
  func.func @_critic_kernel(%arg0: i32, %arg1: memref<32x128xf32, #tpu.memory_space<vmem>>, %arg2: memref<128x32xf32, #tpu.memory_space<vmem>>, %arg3: memref<128x128xf32, #tpu.memory_space<vmem>>, %arg4: memref<128x3xf32, #tpu.memory_space<vmem>>, %arg5: memref<1x1xf32, #tpu.memory_space<smem>>, %arg6: memref<1x128xf32, #tpu.memory_space<vmem>>) attributes {dimension_semantics = [#tpu.dimension_semantics<parallel>], iteration_bounds = array<i64: 1>, scalar_prefetch = 0 : i64, scratch_operands = 0 : i64, tpu.core_type = #tpu.core_type<tc>, window_params = [{transform_indices = @transform_0, window_bounds = array<i64: 32, 128>}, {pipeline_mode = #tpu.pipeline_mode<synchronous>, transform_indices = @transform_1, window_bounds = array<i64: 128, 32>}, {pipeline_mode = #tpu.pipeline_mode<synchronous>, transform_indices = @transform_2, window_bounds = array<i64: 128, 128>}, {pipeline_mode = #tpu.pipeline_mode<synchronous>, transform_indices = @transform_3, window_bounds = array<i64: 128, 3>}, {transform_indices = @transform_4, window_bounds = array<i64: 1, 1>}, {transform_indices = @transform_5, window_bounds = array<i64: 1, 128>}]} {
    %c0 = arith.constant 0 : index
    %c0_0 = arith.constant 0 : index
    %0 = vector.load %arg2[%c0, %c0_0] : memref<128x32xf32, #tpu.memory_space<vmem>>, vector<128x32xf32>
    %c0_1 = arith.constant 0 : index
    %c0_2 = arith.constant 0 : index
    %1 = vector.load %arg1[%c0_1, %c0_2] : memref<32x128xf32, #tpu.memory_space<vmem>>, vector<32x128xf32>
    %cst = arith.constant dense<0.000000e+00> : vector<128x128xf32>
    %2 = tpu.matmul %0, %1, %cst {dimension_numbers = #tpu.dot_dimension_numbers<[1], [0], [0], [1], [0, 0, 1, 1], [], []>} : vector<128x32xf32>, vector<32x128xf32>, vector<128x128xf32> -> vector<128x128xf32>
    %c0_3 = arith.constant 0 : index
    %c0_4 = arith.constant 0 : index
    %3 = vector.load %arg4[%c0_3, %c0_4] : memref<128x3xf32, #tpu.memory_space<vmem>>, vector<128x1xf32>
    %4 = vector.broadcast %3 : vector<128x1xf32> to vector<128x128xf32>
    %5 = arith.addf %2, %4 : vector<128x128xf32>
    %cst_5 = arith.constant 0.000000e+00 : f32
    %6 = vector.broadcast %cst_5 : f32 to vector<128x128xf32>
    %7 = arith.maximumf %5, %6 : vector<128x128xf32>
    %c0_6 = arith.constant 0 : index
    %c0_7 = arith.constant 0 : index
    %8 = vector.load %arg3[%c0_6, %c0_7] : memref<128x128xf32, #tpu.memory_space<vmem>>, vector<128x128xf32>
    %cst_8 = arith.constant dense<0.000000e+00> : vector<128x128xf32>
    %9 = tpu.matmul %8, %7, %cst_8 {dimension_numbers = #tpu.dot_dimension_numbers<[1], [0], [0], [1], [0, 0, 1, 1], [], []>} : vector<128x128xf32>, vector<128x128xf32>, vector<128x128xf32> -> vector<128x128xf32>
    %c0_9 = arith.constant 0 : index
    %c1 = arith.constant 1 : index
    %10 = vector.load %arg4[%c0_9, %c1] : memref<128x3xf32, #tpu.memory_space<vmem>>, vector<128x1xf32>
    %11 = vector.broadcast %10 : vector<128x1xf32> to vector<128x128xf32>
    %12 = arith.addf %9, %11 : vector<128x128xf32>
    %cst_10 = arith.constant 0.000000e+00 : f32
    %13 = vector.broadcast %cst_10 : f32 to vector<128x128xf32>
    %14 = arith.maximumf %12, %13 : vector<128x128xf32>
    %c0_11 = arith.constant 0 : index
    %c2 = arith.constant 2 : index
    %15 = vector.load %arg4[%c0_11, %c2] : memref<128x3xf32, #tpu.memory_space<vmem>>, vector<128x1xf32>
    %16 = vector.broadcast %15 : vector<128x1xf32> to vector<128x128xf32>
    %17 = arith.mulf %14, %16 : vector<128x128xf32>
    %cst_12 = arith.constant dense<0.000000e+00> : vector<128xf32>
    %18 = vector.multi_reduction <add>, %17, %cst_12 [0] : vector<128x128xf32> to vector<128xf32>
    %19 = vector.shape_cast %18 : vector<128xf32> to vector<1x128xf32>
    %c0_13 = arith.constant 0 : index
    %c0_14 = arith.constant 0 : index
    %20 = memref.load %arg5[%c0_13, %c0_14] : memref<1x1xf32, #tpu.memory_space<smem>>
    %21 = vector.broadcast %20 : f32 to vector<1x128xf32>
    %22 = arith.addf %19, %21 : vector<1x128xf32>
    %c0_15 = arith.constant 0 : index
    %c0_16 = arith.constant 0 : index
    %23 = vector.load %arg6[%c0_15, %c0_16] : memref<1x128xf32, #tpu.memory_space<vmem>>, vector<1x128xf32>
    tpu.vector_store %arg6[%c0_15, %c0_16], %22 {strides = array<i32>} : memref<1x128xf32, #tpu.memory_space<vmem>>, vector<1x128xf32>,
    return
  }
  func.func @transform_0(%arg0: i32) -> (i32, i32) {
    %c0_i32 = arith.constant 0 : i32
    %c0_i32_0 = arith.constant 0 : i32
    return %c0_i32, %arg0 : i32, i32
  }
  func.func @transform_1(%arg0: i32) -> (i32, i32) {
    %c0_i32 = arith.constant 0 : i32
    %c0_i32_0 = arith.constant 0 : i32
    %c0_i32_1 = arith.constant 0 : i32
    return %c0_i32, %c0_i32_0 : i32, i32
  }
  func.func @transform_2(%arg0: i32) -> (i32, i32) {
    %c0_i32 = arith.constant 0 : i32
    %c0_i32_0 = arith.constant 0 : i32
    %c0_i32_1 = arith.constant 0 : i32
    return %c0_i32, %c0_i32_0 : i32, i32
  }
  func.func @transform_3(%arg0: i32) -> (i32, i32) {
    %c0_i32 = arith.constant 0 : i32
    %c0_i32_0 = arith.constant 0 : i32
    %c0_i32_1 = arith.constant 0 : i32
    return %c0_i32, %c0_i32_0 : i32, i32
  }
  func.func @transform_4(%arg0: i32) -> (i32, i32) {
    %c0_i32 = arith.constant 0 : i32
    %c0_i32_0 = arith.constant 0 : i32
    %c0_i32_1 = arith.constant 0 : i32
    return %c0_i32, %c0_i32_0 : i32, i32
  }
  func.func @transform_5(%arg0: i32) -> (i32, i32) {
    %c0_i32 = arith.constant 0 : i32
    %c0_i32_0 = arith.constant 0 : i32
    return %c0_i32, %arg0 : i32, i32
  }
}

</mosaic_0001>

<llo_original>
// kernel: squeeze.1
$region0: #{squeeze.1}
  %s0 = inlined_call_operand.vmem [shape: f32[8], index: 0, kind: input, shape index: {}]
  %s1 = inlined_call_operand.hbm [shape: f32[2,4,1], index: 1, kind: output, shape index: {}]
  $region1: #{squeeze.1} parent=0
    #allocation0 [shape = 'u8[1024]{0}', space=vmem, size = 0x400, scoped, tag = 'operand span for operand 1']
    #allocation1 [shape = 's32[1]{0}', space=sflag, size = 0x4, scoped, tag = 'scoped memory for squeeze.1']
    #allocation2 [shape = 'u8[4096]{0}', space=vmem, size = 0x1000, scoped, tag = 'scoped mem for output reshape']
    #allocation3 [shape = 'u8[4096]{0}', space=vmem, size = 0x1000, scoped, tag = 'scoped mem for input reshape']
    %2 = vsyncpa [#allocation1], 0
    %s4 = sshllo.u32 0, 1
    %v5 = vld [vmem:[%s0] sm:%s4]
    %6 = vst [vmem:[#allocation3] sm:%s4] %v5
    %v7 = vld [vmem:[#allocation3] sm:$0x1]
    %vm8 = vcmask 31744
    %9 = vst.msk [vmem:[#allocation2] sm:$0x1] %vm8, %v7
    %v10 = vld [vmem:[#allocation3] sm:$0x1]
    %11 = vrot.lane.b32.xlu0 %v10, 124
    %v12 = vpop.permute.xlu0 %11
    %vm13 = vcmask 31744
    %s14 = scalar_lea.vmem [#allocation2], 1
    %15 = vst.msk [vmem:[%s14] sm:$0x1] %vm13, %v12
    %s17 = sshllo.u32 0, 2
    %v19 = vld [vmem:[#allocation2] sm:%s17]
    %s20 = sshllo.u32 0, 2
    %21 = vst [vmem:[#allocation0] sm:%s20] %v19
    %s23 = ssub.s32 32, 32
    %24 = vsyncadd [#allocation1], %s23
    %s26 = sshll.u32 [#allocation0], 4
    %s27 = int_to_ptr.vmem [resolvable:$true] %s26
    %29 = dma.vmem_to_hbm [thread:$0]  %s27, 32, %s1, [#allocation1]
    %30 = dma.done [#allocation1], 32
    %31 = vsyncpa [#allocation1], 1

// kernel: vanilla_critic_forward.1
$region0: #{vanilla_critic_forward.1}
  #allocation0 [shape = 'u32[]', space=smem, size = 0x4, offset = 0x4, fixed_abs, tag = 'smem constant byte address 0x4 - core index']
  #allocation1 [shape = 'u32[144,128]{1,0:T(1,128)}', space=vmem, size = 0x12000, scoped, tag = 'internal scratch']
  #allocation2 [shape = 'f32[1,1]{1,0:T(1,128)S(6)}', space=smem, size = 0x200, scoped, tag = 'scoped memory for vanilla_critic_forward.1']
  %s0 = inlined_call_operand.vmem [shape: f32[32,128], index: 0, kind: input, shape index: {}]
  %s1 = inlined_call_operand.vmem [shape: f32[128,32], index: 1, kind: input, shape index: {}]
  %s2 = inlined_call_operand.vmem [shape: f32[128,128], index: 2, kind: input, shape index: {}]
  %s3 = inlined_call_operand.vmem [shape: f32[128,3], index: 3, kind: input, shape index: {}]
  %s4 = inlined_call_operand.<no memory space> [shape: f32[1,1], index: 4, kind: input, shape index: {}]
  %s5 = inlined_call_operand.vmem [shape: f32[1,128], index: 5, kind: output, shape index: {}]
  %s6 = sld [smem:[#allocation0]]
  $region30: #{vanilla_critic_forward.1} parent=0
    _
  %s8 = ssub.s32 1, %s6
  %s9 = scalar_select 0, %s8, %s6
  %10 = sst [smem:[#allocation2]] %s4
  // Predicated region
  $region2: #{vanilla_critic_forward.1} parent=0 // pred_check
    _
  $region3: #{vanilla_critic_forward.1} parent=0 // pred_check_branch
    %12 = sbr.rel (0) target = $region5
  $region4: #{vanilla_critic_forward.1} parent=0 // pred_region
    _
  $region5: #{vanilla_critic_forward.1} parent=0 // pred_fallthru
    _
  // Predicated region
  $region6: #{vanilla_critic_forward.1} parent=0 // pred_check
    _
  $region7: #{vanilla_critic_forward.1} parent=0 // pred_check_branch
    %14 = sbr.rel (0) target = $region9
  $region8: #{vanilla_critic_forward.1} parent=0 // pred_region
    _
  $region9: #{vanilla_critic_forward.1} parent=0 // pred_fallthru
    _
  // Predicated region
  $region10: #{vanilla_critic_forward.1} parent=0 // pred_check
    _
  $region11: #{vanilla_critic_forward.1} parent=0 // pred_check_branch
    %16 = sbr.rel (0) target = $region13
  $region12: #{vanilla_critic_forward.1} parent=0 // pred_region
    _
  $region13: #{vanilla_critic_forward.1} parent=0 // pred_fallthru
    _
  // Predicated region
  $region14: #{vanilla_critic_forward.1} parent=0 // pred_check
    _
  $region15: #{vanilla_critic_forward.1} parent=0 // pred_check_branch
    %18 = sbr.rel (0) target = $region17
  $region16: #{vanilla_critic_forward.1} parent=0 // pred_region
    _
  $region17: #{vanilla_critic_forward.1} parent=0 // pred_fallthru
    _
  // Predicated region
  $region18: #{vanilla_critic_forward.1} parent=0 // pred_check
    _
  $region19: #{vanilla_critic_forward.1} parent=0 // pred_check_branch
    %20 = sbr.rel (0) target = $region21
  $region20: #{vanilla_critic_forward.1} parent=0 // pred_region
    _
  $region21: #{vanilla_critic_forward.1} parent=0 // pred_fallthru
    _
  %v21 = vld [vmem:[%s1] sm:$0xff]
  %v22 = vld [vmem:[%s1 + $0x8] sm:$0xff]
  %v23 = vld [vmem:[%s1 + $0x10] sm:$0xff]
  %v24 = vld [vmem:[%s1 + $0x18] sm:$0xff]
  %v25 = vld [vmem:[%s1 + $0x20] sm:$0xff]
  %v26 = vld [vmem:[%s1 + $0x28] sm:$0xff]
  %v27 = vld [vmem:[%s1 + $0x30] sm:$0xff]
  %v28 = vld [vmem:[%s1 + $0x38] sm:$0xff]
  %v29 = vld [vmem:[%s1 + $0x40] sm:$0xff]
  %v30 = vld [vmem:[%s1 + $0x48] sm:$0xff]
  %v31 = vld [vmem:[%s1 + $0x50] sm:$0xff]
  %v32 = vld [vmem:[%s1 + $0x58] sm:$0xff]
  %v33 = vld [vmem:[%s1 + $0x60] sm:$0xff]
  %v34 = vld [vmem:[%s1 + $0x68] sm:$0xff]
  %v35 = vld [vmem:[%s1 + $0x70] sm:$0xff]
  %v36 = vld [vmem:[%s1 + $0x78] sm:$0xff]
  %v37 = vld [vmem:[%s0] sm:$0xff]
  %v38 = vld [vmem:[%s0 + $0x8] sm:$0xff]
  %v39 = vld [vmem:[%s0 + $0x10] sm:$0xff]
  %v40 = vld [vmem:[%s0 + $0x18] sm:$0xff]
  %v41 = vld [vmem:[%s3] sm:$0xff]
  %v42 = vld [vmem:[%s3 + $0x8] sm:$0xff]
  %v43 = vld [vmem:[%s3 + $0x10] sm:$0xff]
  %v44 = vld [vmem:[%s3 + $0x18] sm:$0xff]
  %v45 = vld [vmem:[%s3 + $0x20] sm:$0xff]
  %v46 = vld [vmem:[%s3 + $0x28] sm:$0xff]
  %v47 = vld [vmem:[%s3 + $0x30] sm:$0xff]
  %v48 = vld [vmem:[%s3 + $0x38] sm:$0xff]
  %v49 = vld [vmem:[%s3 + $0x40] sm:$0xff]
  %v50 = vld [vmem:[%s3 + $0x48] sm:$0xff]
  %v51 = vld [vmem:[%s3 + $0x50] sm:$0xff]
  %v52 = vld [vmem:[%s3 + $0x58] sm:$0xff]
  %v53 = vld [vmem:[%s3 + $0x60] sm:$0xff]
  %v54 = vld [vmem:[%s3 + $0x68] sm:$0xff]
  %v55 = vld [vmem:[%s3 + $0x70] sm:$0xff]
  %v56 = vld [vmem:[%s3 + $0x78] sm:$0xff]
  %58 = vset.pattern.permute.xlu0 0
  %59 = vperm.xlu0 %58, %v41
  %v60 = vpop.permute.xlu0 %59
  %63 = vset.pattern.permute.xlu0 0
  %64 = vperm.xlu0 %63, %v42
  %v65 = vpop.permute.xlu0 %64
  %68 = vset.pattern.permute.xlu0 0
  %69 = vperm.xlu0 %68, %v43
  %v70 = vpop.permute.xlu0 %69
  %73 = vset.pattern.permute.xlu0 0
  %74 = vperm.xlu0 %73, %v44
  %v75 = vpop.permute.xlu0 %74
  %78 = vset.pattern.permute.xlu0 0
  %79 = vperm.xlu0 %78, %v45
  %v80 = vpop.permute.xlu0 %79
  %83 = vset.pattern.permute.xlu0 0
  %84 = vperm.xlu0 %83, %v46
  %v85 = vpop.permute.xlu0 %84
  %88 = vset.pattern.permute.xlu0 0
  %89 = vperm.xlu0 %88, %v47
  %v90 = vpop.permute.xlu0 %89
  %93 = vset.pattern.permute.xlu0 0
  %94 = vperm.xlu0 %93, %v48
  %v95 = vpop.permute.xlu0 %94
  %98 = vset.pattern.permute.xlu0 0
  %99 = vperm.xlu0 %98, %v49
  %v100 = vpop.permute.xlu0 %99
  %103 = vset.pattern.permute.xlu0 0
  %104 = vperm.xlu0 %103, %v50
  %v105 = vpop.permute.xlu0 %104
  %108 = vset.pattern.permute.xlu0 0
  %109 = vperm.xlu0 %108, %v51
  %v110 = vpop.permute.xlu0 %109
  %113 = vset.pattern.permute.xlu0 0
  %114 = vperm.xlu0 %113, %v52
  %v115 = vpop.permute.xlu0 %114
  %118 = vset.pattern.permute.xlu0 0
  %119 = vperm.xlu0 %118, %v53
  %v120 = vpop.permute.xlu0 %119
  %123 = vset.pattern.permute.xlu0 0
  %124 = vperm.xlu0 %123, %v54
  %v125 = vpop.permute.xlu0 %124
  %128 = vset.pattern.permute.xlu0 0
  %129 = vperm.xlu0 %128, %v55
  %v130 = vpop.permute.xlu0 %129
  %133 = vset.pattern.permute.xlu0 0
  %134 = vperm.xlu0 %133, %v56
  %v135 = vpop.permute.xlu0 %134
  %vm137 = vcmask 261120
  %v139 = vsel %vm137, %v21, 0
  %v142 = vsel %vm137, %v22, 0
  %v145 = vsel %vm137, %v23, 0
  %v148 = vsel %vm137, %v24, 0
  %v151 = vsel %vm137, %v25, 0
  %v154 = vsel %vm137, %v26, 0
  %v157 = vsel %vm137, %v27, 0
  %v160 = vsel %vm137, %v28, 0
  %v163 = vsel %vm137, %v29, 0
  %v166 = vsel %vm137, %v30, 0
  %v169 = vsel %vm137, %v31, 0
  %v172 = vsel %vm137, %v32, 0
  %v175 = vsel %vm137, %v33, 0
  %v178 = vsel %vm137, %v34, 0
  %v181 = vsel %vm137, %v35, 0
  %v184 = vsel %vm137, %v36, 0
  %186 = vmatprep.subr.mxu0 0.0
  %187 = vmatpush1.msra.mxu0 %v37
  %188 = vmatprep.subr.mxu0 0.0
  %189 = vmatpush1.msra.mxu0 %v38
  %190 = vmatprep.subr.mxu0 0.0
  %191 = vmatpush1.msra.mxu0 %v39
  %192 = vmatprep.subr.mxu0 0.0
  %193 = vmatpush1.msra.mxu0 %v40
  %194 = vmatprep.subr.mxu0 0.0
  %195 = vmatpush1.msra.mxu0 0.0
  %196 = vmatprep.subr.mxu0 0.0
  %197 = vmatpush1.msra.mxu0 0.0
  %198 = vmatprep.subr.mxu0 0.0
  %199 = vmatpush1.msra.mxu0 0.0
  %200 = vmatprep.subr.mxu0 0.0
  %201 = vmatpush1.msra.mxu0 0.0
  %202 = vmatprep.subr.mxu0 0.0
  %203 = vmatpush1.msra.mxu0 0.0
  %204 = vmatprep.subr.mxu0 0.0
  %205 = vmatpush1.msra.mxu0 0.0
  %206 = vmatprep.subr.mxu0 0.0
  %207 = vmatpush1.msra.mxu0 0.0
  %208 = vmatprep.subr.mxu0 0.0
  %209 = vmatpush1.msra.mxu0 0.0
  %210 = vmatprep.subr.mxu0 0.0
  %211 = vmatpush1.msra.mxu0 0.0
  %212 = vmatprep.subr.mxu0 0.0
  %213 = vmatpush1.msra.mxu0 0.0
  %214 = vmatprep.subr.mxu0 0.0
  %215 = vmatpush1.msra.mxu0 0.0
  %216 = vmatprep.subr.mxu0 0.0
  %217 = vmatpush1.msra.mxu0 0.0
  %218 = vmatprep.subr.mxu0 0.0
  %219 = vmatpush1.msra.mxu0 0.0
  %220 = vmatprep.subr.mxu0 0.0
  %221 = vmatpush1.msra.mxu0 0.0
  %222 = vmatprep.subr.mxu0 0.0
  %223 = vmatpush1.msra.mxu0 0.0
  %224 = vmatprep.subr.mxu0 0.0
  %225 = vmatpush1.msra.mxu0 0.0
  %226 = vmatprep.subr.mxu0 0.0
  %227 = vmatpush1.msra.mxu0 0.0
  %228 = vmatprep.subr.mxu0 0.0
  %229 = vmatpush1.msra.mxu0 0.0
  %230 = vmatprep.subr.mxu0 0.0
  %231 = vmatpush1.msra.mxu0 0.0
  %232 = vmatprep.subr.mxu0 0.0
  %233 = vmatpush1.msra.mxu0 0.0
  %234 = vmatprep.subr.mxu0 0.0
  %235 = vmatpush1.msra.mxu0 0.0
  %236 = vmatprep.subr.mxu0 0.0
  %237 = vmatpush1.msra.mxu0 0.0
  %238 = vmatprep.subr.mxu0 0.0
  %239 = vmatpush1.msra.mxu0 0.0
  %240 = vmatprep.subr.mxu0 0.0
  %241 = vmatpush1.msra.mxu0 0.0
  %242 = vmatprep.subr.mxu0 0.0
  %243 = vmatpush1.msra.mxu0 0.0
  %244 = vmatprep.subr.mxu0 0.0
  %245 = vmatpush1.msra.mxu0 0.0
  %246 = vmatprep.subr.mxu0 0.0
  %247 = vmatpush1.msra.mxu0 0.0
  %248 = vmatprep.subr.mxu0 0.0
  %249 = vmatpush1.msra.mxu0 0.0
  %250 = vmatprep.mubr.f32.mxu0 0.0
  %251 = vmatmul.mubr.f32.gmra.mrb[0].mxu0 %v139
  %v252 = vpop.f32.mrb[0].mxu0
  %v253 = vadd.f32 %v60, %v252
  %v254 = vpop.f32.mrb[0].mxu0
  %255 = vmatprep.mubr.f32.mxu0 0.0
  %256 = vmatmul.mubr.f32.gmra.mrb[0].mxu0 %v142
  %v257 = vpop.f32.mrb[0].mxu0
  %v258 = vadd.f32 %v65, %v257
  %v259 = vpop.f32.mrb[0].mxu0
  %260 = vmatprep.mubr.f32.mxu0 0.0
  %261 = vmatmul.mubr.f32.gmra.mrb[0].mxu0 %v145
  %v262 = vpop.f32.mrb[0].mxu0
  %v263 = vadd.f32 %v70, %v262
  %v264 = vpop.f32.mrb[0].mxu0
  %265 = vmatprep.mubr.f32.mxu0 0.0
  %266 = vmatmul.mubr.f32.gmra.mrb[0].mxu0 %v148
  %v267 = vpop.f32.mrb[0].mxu0
  %v268 = vadd.f32 %v75, %v267
  %v269 = vpop.f32.mrb[0].mxu0
  %270 = vmatprep.mubr.f32.mxu0 0.0
  %271 = vmatmul.mubr.f32.gmra.mrb[0].mxu0 %v151
  %v272 = vpop.f32.mrb[0].mxu0
  %v273 = vadd.f32 %v80, %v272
  %v274 = vpop.f32.mrb[0].mxu0
  %275 = vmatprep.mubr.f32.mxu0 0.0
  %276 = vmatmul.mubr.f32.gmra.mrb[0].mxu0 %v154
  %v277 = vpop.f32.mrb[0].mxu0
  %v278 = vadd.f32 %v85, %v277
  %v279 = vpop.f32.mrb[0].mxu0
  %280 = vmatprep.mubr.f32.mxu0 0.0
  %281 = vmatmul.mubr.f32.gmra.mrb[0].mxu0 %v157
  %v282 = vpop.f32.mrb[0].mxu0
  %v283 = vadd.f32 %v90, %v282
  %v284 = vpop.f32.mrb[0].mxu0
  %285 = vmatprep.mubr.f32.mxu0 0.0
  %286 = vmatmul.mubr.f32.gmra.mrb[0].mxu0 %v160
  %v287 = vpop.f32.mrb[0].mxu0
  %v288 = vadd.f32 %v95, %v287
  %v289 = vpop.f32.mrb[0].mxu0
  %290 = vmatprep.mubr.f32.mxu0 0.0
  %291 = vmatmul.mubr.f32.gmra.mrb[0].mxu0 %v163
  %v292 = vpop.f32.mrb[0].mxu0
  %v293 = vadd.f32 %v100, %v292
  %v294 = vpop.f32.mrb[0].mxu0
  %295 = vmatprep.mubr.f32.mxu0 0.0
  %296 = vmatmul.mubr.f32.gmra.mrb[0].mxu0 %v166
  %v297 = vpop.f32.mrb[0].mxu0
  %v298 = vadd.f32 %v105, %v297
  %v299 = vpop.f32.mrb[0].mxu0
  %300 = vmatprep.mubr.f32.mxu0 0.0
  %301 = vmatmul.mubr.f32.gmra.mrb[0].mxu0 %v169
  %v302 = vpop.f32.mrb[0].mxu0
  %v303 = vadd.f32 %v110, %v302
  %v304 = vpop.f32.mrb[0].mxu0
  %305 = vmatprep.mubr.f32.mxu0 0.0
  %306 = vmatmul.mubr.f32.gmra.mrb[0].mxu0 %v172
  %v307 = vpop.f32.mrb[0].mxu0
  %v308 = vadd.f32 %v115, %v307
  %v309 = vpop.f32.mrb[0].mxu0
  %310 = vmatprep.mubr.f32.mxu0 0.0
  %311 = vmatmul.mubr.f32.gmra.mrb[0].mxu0 %v175
  %v312 = vpop.f32.mrb[0].mxu0
  %v313 = vadd.f32 %v120, %v312
  %v314 = vpop.f32.mrb[0].mxu0
  %315 = vmatprep.mubr.f32.mxu0 0.0
  %316 = vmatmul.mubr.f32.gmra.mrb[0].mxu0 %v178
  %v317 = vpop.f32.mrb[0].mxu0
  %v318 = vadd.f32 %v125, %v317
  %v319 = vpop.f32.mrb[0].mxu0
  %320 = vmatprep.mubr.f32.mxu0 0.0
  %321 = vmatmul.mubr.f32.gmra.mrb[0].mxu0 %v181
  %v322 = vpop.f32.mrb[0].mxu0
  %v323 = vadd.f32 %v130, %v322
  %v324 = vpop.f32.mrb[0].mxu0
  %325 = vmatprep.mubr.f32.mxu0 0.0
  %326 = vmatmul.mubr.f32.gmra.mrb[0].mxu0 %v184
  %v327 = vpop.f32.mrb[0].mxu0
  %v328 = vadd.f32 %v135, %v327
  %v329 = vpop.f32.mrb[0].mxu0
  %330 = vdwg.mxu0
  %v331 = vmax.f32 %v253, 0.0
  %v332 = vmax.f32 %v258, 0.0
  %v333 = vmax.f32 %v263, 0.0
  %v334 = vmax.f32 %v268, 0.0
  %v335 = vmax.f32 %v273, 0.0
  %v336 = vmax.f32 %v278, 0.0
  %v337 = vmax.f32 %v283, 0.0
  %v338 = vmax.f32 %v288, 0.0
  %v339 = vmax.f32 %v293, 0.0
  %v340 = vmax.f32 %v298, 0.0
  %v341 = vmax.f32 %v303, 0.0
  %v342 = vmax.f32 %v308, 0.0
  %v343 = vmax.f32 %v313, 0.0
  %v344 = vmax.f32 %v318, 0.0
  %v345 = vmax.f32 %v323, 0.0
  %v346 = vmax.f32 %v328, 0.0
  %v347 = vld [vmem:[%s2] sm:$0xff]
  %v348 = vld [vmem:[%s2 + $0x8] sm:$0xff]
  %v349 = vld [vmem:[%s2 + $0x10] sm:$0xff]
  %v350 = vld [vmem:[%s2 + $0x18] sm:$0xff]
  %v351 = vld [vmem:[%s2 + $0x20] sm:$0xff]
  %v352 = vld [vmem:[%s2 + $0x28] sm:$0xff]
  %v353 = vld [vmem:[%s2 + $0x30] sm:$0xff]
  %v354 = vld [vmem:[%s2 + $0x38] sm:$0xff]
  %v355 = vld [vmem:[%s2 + $0x40] sm:$0xff]
  %v356 = vld [vmem:[%s2 + $0x48] sm:$0xff]
  %v357 = vld [vmem:[%s2 + $0x50] sm:$0xff]
  %v358 = vld [vmem:[%s2 + $0x58] sm:$0xff]
  %v359 = vld [vmem:[%s2 + $0x60] sm:$0xff]
  %v360 = vld [vmem:[%s2 + $0x68] sm:$0xff]
  %v361 = vld [vmem:[%s2 + $0x70] sm:$0xff]
  %v362 = vld [vmem:[%s2 + $0x78] sm:$0xff]
  %363 = vset.pattern.permute.xlu0 1
  %364 = vperm.xlu0 %363, %v41
  %v365 = vpop.permute.xlu0 %364
  %367 = vset.pattern.permute.xlu0 1
  %368 = vperm.xlu0 %367, %v42
  %v369 = vpop.permute.xlu0 %368
  %371 = vset.pattern.permute.xlu0 1
  %372 = vperm.xlu0 %371, %v43
  %v373 = vpop.permute.xlu0 %372
  %375 = vset.pattern.permute.xlu0 1
  %376 = vperm.xlu0 %375, %v44
  %v377 = vpop.permute.xlu0 %376
  %379 = vset.pattern.permute.xlu0 1
  %380 = vperm.xlu0 %379, %v45
  %v381 = vpop.permute.xlu0 %380
  %383 = vset.pattern.permute.xlu0 1
  %384 = vperm.xlu0 %383, %v46
  %v385 = vpop.permute.xlu0 %384
  %387 = vset.pattern.permute.xlu0 1
  %388 = vperm.xlu0 %387, %v47
  %v389 = vpop.permute.xlu0 %388
  %391 = vset.pattern.permute.xlu0 1
  %392 = vperm.xlu0 %391, %v48
  %v393 = vpop.permute.xlu0 %392
  %395 = vset.pattern.permute.xlu0 1
  %396 = vperm.xlu0 %395, %v49
  %v397 = vpop.permute.xlu0 %396
  %399 = vset.pattern.permute.xlu0 1
  %400 = vperm.xlu0 %399, %v50
  %v401 = vpop.permute.xlu0 %400
  %403 = vset.pattern.permute.xlu0 1
  %404 = vperm.xlu0 %403, %v51
  %v405 = vpop.permute.xlu0 %404
  %407 = vset.pattern.permute.xlu0 1
  %408 = vperm.xlu0 %407, %v52
  %v409 = vpop.permute.xlu0 %408
  %411 = vset.pattern.permute.xlu0 1
  %412 = vperm.xlu0 %411, %v53
  %v413 = vpop.permute.xlu0 %412
  %415 = vset.pattern.permute.xlu0 1
  %416 = vperm.xlu0 %415, %v54
  %v417 = vpop.permute.xlu0 %416
  %419 = vset.pattern.permute.xlu0 1
  %420 = vperm.xlu0 %419, %v55
  %v421 = vpop.permute.xlu0 %420
  %423 = vset.pattern.permute.xlu0 1
  %424 = vperm.xlu0 %423, %v56
  %v425 = vpop.permute.xlu0 %424
  %427 = vmatprep.subr.mxu0 0.0
  %428 = vmatpush1.msra.mxu0 %v331
  %429 = vmatprep.subr.mxu0 0.0
  %430 = vmatpush1.msra.mxu0 %v332
  %431 = vmatprep.subr.mxu0 0.0
  %432 = vmatpush1.msra.mxu0 %v333
  %433 = vmatprep.subr.mxu0 0.0
  %434 = vmatpush1.msra.mxu0 %v334
  %435 = vmatprep.subr.mxu0 0.0
  %436 = vmatpush1.msra.mxu0 %v335
  %437 = vmatprep.subr.mxu0 0.0
  %438 = vmatpush1.msra.mxu0 %v336
  %439 = vmatprep.subr.mxu0 0.0
  %440 = vmatpush1.msra.mxu0 %v337
  %441 = vmatprep.subr.mxu0 0.0
  %442 = vmatpush1.msra.mxu0 %v338
  %443 = vmatprep.subr.mxu0 0.0
  %444 = vmatpush1.msra.mxu0 %v339
  %445 = vmatprep.subr.mxu0 0.0
  %446 = vmatpush1.msra.mxu0 %v340
  %447 = vmatprep.subr.mxu0 0.0
  %448 = vmatpush1.msra.mxu0 %v341
  %449 = vmatprep.subr.mxu0 0.0
  %450 = vmatpush1.msra.mxu0 %v342
  %451 = vmatprep.subr.mxu0 0.0
  %452 = vmatpush1.msra.mxu0 %v343
  %453 = vmatprep.subr.mxu0 0.0
  %454 = vmatpush1.msra.mxu0 %v344
  %455 = vmatprep.subr.mxu0 0.0
  %456 = vmatpush1.msra.mxu0 %v345
  %457 = vmatprep.subr.mxu0 0.0
  %458 = vmatpush1.msra.mxu0 %v346
  %459 = vmatprep.subr.mxu0 0.0
  %460 = vmatpush1.msra.mxu0 0.0
  %461 = vmatprep.subr.mxu0 0.0
  %462 = vmatpush1.msra.mxu0 0.0
  %463 = vmatprep.subr.mxu0 0.0
  %464 = vmatpush1.msra.mxu0 0.0
  %465 = vmatprep.subr.mxu0 0.0
  %466 = vmatpush1.msra.mxu0 0.0
  %467 = vmatprep.subr.mxu0 0.0
  %468 = vmatpush1.msra.mxu0 0.0
  %469 = vmatprep.subr.mxu0 0.0
  %470 = vmatpush1.msra.mxu0 0.0
  %471 = vmatprep.subr.mxu0 0.0
  %472 = vmatpush1.msra.mxu0 0.0
  %473 = vmatprep.subr.mxu0 0.0
  %474 = vmatpush1.msra.mxu0 0.0
  %475 = vmatprep.subr.mxu0 0.0
  %476 = vmatpush1.msra.mxu0 0.0
  %477 = vmatprep.subr.mxu0 0.0
  %478 = vmatpush1.msra.mxu0 0.0
  %479 = vmatprep.subr.mxu0 0.0
  %480 = vmatpush1.msra.mxu0 0.0
  %481 = vmatprep.subr.mxu0 0.0
  %482 = vmatpush1.msra.mxu0 0.0
  %483 = vmatprep.subr.mxu0 0.0
  %484 = vmatpush1.msra.mxu0 0.0
  %485 = vmatprep.subr.mxu0 0.0
  %486 = vmatpush1.msra.mxu0 0.0
  %487 = vmatprep.subr.mxu0 0.0
  %488 = vmatpush1.msra.mxu0 0.0
  %489 = vmatprep.subr.mxu0 0.0
  %490 = vmatpush1.msra.mxu0 0.0
  %491 = vmatprep.mubr.f32.mxu0 0.0
  %492 = vmatmul.mubr.f32.gmra.mrb[0].mxu0 %v347
  %v493 = vpop.f32.mrb[0].mxu0
  %v494 = vadd.f32 %v365, %v493
  %v495 = vpop.f32.mrb[0].mxu0
  %496 = vmatprep.mubr.f32.mxu0 0.0
  %497 = vmatmul.mubr.f32.gmra.mrb[0].mxu0 %v348
  %v498 = vpop.f32.mrb[0].mxu0
  %v499 = vadd.f32 %v369, %v498
  %v500 = vpop.f32.mrb[0].mxu0
  %501 = vmatprep.mubr.f32.mxu0 0.0
  %502 = vmatmul.mubr.f32.gmra.mrb[0].mxu0 %v349
  %v503 = vpop.f32.mrb[0].mxu0
  %v504 = vadd.f32 %v373, %v503
  %v505 = vpop.f32.mrb[0].mxu0
  %506 = vmatprep.mubr.f32.mxu0 0.0
  %507 = vmatmul.mubr.f32.gmra.mrb[0].mxu0 %v350
  %v508 = vpop.f32.mrb[0].mxu0
  %v509 = vadd.f32 %v377, %v508
  %v510 = vpop.f32.mrb[0].mxu0
  %511 = vmatprep.mubr.f32.mxu0 0.0
  %512 = vmatmul.mubr.f32.gmra.mrb[0].mxu0 %v351
  %v513 = vpop.f32.mrb[0].mxu0
  %v514 = vadd.f32 %v381, %v513
  %v515 = vpop.f32.mrb[0].mxu0
  %516 = vmatprep.mubr.f32.mxu0 0.0
  %517 = vmatmul.mubr.f32.gmra.mrb[0].mxu0 %v352
  %v518 = vpop.f32.mrb[0].mxu0
  %v519 = vadd.f32 %v385, %v518
  %v520 = vpop.f32.mrb[0].mxu0
  %521 = vmatprep.mubr.f32.mxu0 0.0
  %522 = vmatmul.mubr.f32.gmra.mrb[0].mxu0 %v353
  %v523 = vpop.f32.mrb[0].mxu0
  %v524 = vadd.f32 %v389, %v523
  %v525 = vpop.f32.mrb[0].mxu0
  %526 = vmatprep.mubr.f32.mxu0 0.0
  %527 = vmatmul.mubr.f32.gmra.mrb[0].mxu0 %v354
  %v528 = vpop.f32.mrb[0].mxu0
  %v529 = vadd.f32 %v393, %v528
  %v530 = vpop.f32.mrb[0].mxu0
  %531 = vmatprep.mubr.f32.mxu0 0.0
  %532 = vmatmul.mubr.f32.gmra.mrb[0].mxu0 %v355
  %v533 = vpop.f32.mrb[0].mxu0
  %v534 = vadd.f32 %v397, %v533
  %v535 = vpop.f32.mrb[0].mxu0
  %536 = vmatprep.mubr.f32.mxu0 0.0
  %537 = vmatmul.mubr.f32.gmra.mrb[0].mxu0 %v356
  %v538 = vpop.f32.mrb[0].mxu0
  %v539 = vadd.f32 %v401, %v538
  %v540 = vpop.f32.mrb[0].mxu0
  %541 = vmatprep.mubr.f32.mxu0 0.0
  %542 = vmatmul.mubr.f32.gmra.mrb[0].mxu0 %v357
  %v543 = vpop.f32.mrb[0].mxu0
  %v544 = vadd.f32 %v405, %v543
  %v545 = vpop.f32.mrb[0].mxu0
  %546 = vmatprep.mubr.f32.mxu0 0.0
  %547 = vmatmul.mubr.f32.gmra.mrb[0].mxu0 %v358
  %v548 = vpop.f32.mrb[0].mxu0
  %v549 = vadd.f32 %v409, %v548
  %v550 = vpop.f32.mrb[0].mxu0
  %551 = vmatprep.mubr.f32.mxu0 0.0
  %552 = vmatmul.mubr.f32.gmra.mrb[0].mxu0 %v359
  %v553 = vpop.f32.mrb[0].mxu0
  %v554 = vadd.f32 %v413, %v553
  %v555 = vpop.f32.mrb[0].mxu0
  %556 = vmatprep.mubr.f32.mxu0 0.0
  %557 = vmatmul.mubr.f32.gmra.mrb[0].mxu0 %v360
  %v558 = vpop.f32.mrb[0].mxu0
  %v559 = vadd.f32 %v417, %v558
  %v560 = vpop.f32.mrb[0].mxu0
  %561 = vmatprep.mubr.f32.mxu0 0.0
  %562 = vmatmul.mubr.f32.gmra.mrb[0].mxu0 %v361
  %v563 = vpop.f32.mrb[0].mxu0
  %v564 = vadd.f32 %v421, %v563
  %v565 = vpop.f32.mrb[0].mxu0
  %566 = vmatprep.mubr.f32.mxu0 0.0
  %567 = vmatmul.mubr.f32.gmra.mrb[0].mxu0 %v362
  %v568 = vpop.f32.mrb[0].mxu0
  %v569 = vadd.f32 %v425, %v568
  %v570 = vpop.f32.mrb[0].mxu0
  %571 = vdwg.mxu0
  %v572 = vmax.f32 %v494, 0.0
  %v573 = vmax.f32 %v499, 0.0
  %v574 = vmax.f32 %v504, 0.0
  %v575 = vmax.f32 %v509, 0.0
  %v576 = vmax.f32 %v514, 0.0
  %v577 = vmax.f32 %v519, 0.0
  %v578 = vmax.f32 %v524, 0.0
  %v579 = vmax.f32 %v529, 0.0
  %v580 = vmax.f32 %v534, 0.0
  %v581 = vmax.f32 %v539, 0.0
  %v582 = vmax.f32 %v544, 0.0
  %v583 = vmax.f32 %v549, 0.0
  %v584 = vmax.f32 %v554, 0.0
  %v585 = vmax.f32 %v559, 0.0
  %v586 = vmax.f32 %v564, 0.0
  %v587 = vmax.f32 %v569, 0.0
  %588 = vset.pattern.permute.xlu0 2
  %589 = vperm.xlu0 %588, %v41
  %v590 = vpop.permute.xlu0 %589
  %592 = vset.pattern.permute.xlu0 2
  %593 = vperm.xlu0 %592, %v42
  %v594 = vpop.permute.xlu0 %593
  %596 = vset.pattern.permute.xlu0 2
  %597 = vperm.xlu0 %596, %v43
  %v598 = vpop.permute.xlu0 %597
  %600 = vset.pattern.permute.xlu0 2
  %601 = vperm.xlu0 %600, %v44
  %v602 = vpop.permute.xlu0 %601
  %604 = vset.pattern.permute.xlu0 2
  %605 = vperm.xlu0 %604, %v45
  %v606 = vpop.permute.xlu0 %605
  %608 = vset.pattern.permute.xlu0 2
  %609 = vperm.xlu0 %608, %v46
  %v610 = vpop.permute.xlu0 %609
  %612 = vset.pattern.permute.xlu0 2
  %613 = vperm.xlu0 %612, %v47
  %v614 = vpop.permute.xlu0 %613
  %616 = vset.pattern.permute.xlu0 2
  %617 = vperm.xlu0 %616, %v48
  %v618 = vpop.permute.xlu0 %617
  %620 = vset.pattern.permute.xlu0 2
  %621 = vperm.xlu0 %620, %v49
  %v622 = vpop.permute.xlu0 %621
  %624 = vset.pattern.permute.xlu0 2
  %625 = vperm.xlu0 %624, %v50
  %v626 = vpop.permute.xlu0 %625
  %628 = vset.pattern.permute.xlu0 2
  %629 = vperm.xlu0 %628, %v51
  %v630 = vpop.permute.xlu0 %629
  %632 = vset.pattern.permute.xlu0 2
  %633 = vperm.xlu0 %632, %v52
  %v634 = vpop.permute.xlu0 %633
  %636 = vset.pattern.permute.xlu0 2
  %637 = vperm.xlu0 %636, %v53
  %v638 = vpop.permute.xlu0 %637
  %640 = vset.pattern.permute.xlu0 2
  %641 = vperm.xlu0 %640, %v54
  %v642 = vpop.permute.xlu0 %641
  %644 = vset.pattern.permute.xlu0 2
  %645 = vperm.xlu0 %644, %v55
  %v646 = vpop.permute.xlu0 %645
  %648 = vset.pattern.permute.xlu0 2
  %649 = vperm.xlu0 %648, %v56
  %v650 = vpop.permute.xlu0 %649
  %v652 = vmul.f32 %v572, %v590
  %v653 = vmul.f32 %v573, %v594
  %v654 = vmul.f32 %v574, %v598
  %v655 = vmul.f32 %v575, %v602
  %v656 = vmul.f32 %v576, %v606
  %v657 = vmul.f32 %v577, %v610
  %v658 = vmul.f32 %v578, %v614
  %v659 = vmul.f32 %v579, %v618
  %v660 = vmul.f32 %v580, %v622
  %v661 = vmul.f32 %v581, %v626
  %v662 = vmul.f32 %v582, %v630
  %v663 = vmul.f32 %v583, %v634
  %v664 = vmul.f32 %v584, %v638
  %v665 = vmul.f32 %v585, %v642
  %v666 = vmul.f32 %v586, %v646
  %v667 = vmul.f32 %v587, %v650
  %v668 = vadd.f32 %v652, %v653
  %v669 = vadd.f32 %v668, %v654
  %v670 = vadd.f32 %v669, %v655
  %v671 = vadd.f32 %v670, %v656
  %v672 = vadd.f32 %v671, %v657
  %v673 = vadd.f32 %v672, %v658
  %v674 = vadd.f32 %v673, %v659
  %v675 = vadd.f32 %v674, %v660
  %v676 = vadd.f32 %v675, %v661
  %v677 = vadd.f32 %v676, %v662
  %v678 = vadd.f32 %v677, %v663
  %v679 = vadd.f32 %v678, %v664
  %v680 = vadd.f32 %v679, %v665
  %v681 = vadd.f32 %v680, %v666
  %v682 = vadd.f32 %v681, %v667
  %v683 = vrot.slane %v682, 4
  %v684 = vadd.f32 %v682, %v683
  %v685 = vrot.slane %v684, 2
  %v686 = vadd.f32 %v684, %v685
  %v687 = vrot.slane %v686, 1
  %v688 = vadd.f32 %v686, %v687
  %s689 = sld [smem:[#allocation2]]
  %v690 = vstv %s689
  %v691 = vadd.f32 %v688, %v690
  %692 = vst [vmem:[%s5] sm:$0x1] %v691
  // Predicated region
  $region22: #{vanilla_critic_forward.1} parent=0 // pred_check
    _
  $region23: #{vanilla_critic_forward.1} parent=0 // pred_check_branch
    %694 = sbr.rel (0) target = $region25
  $region24: #{vanilla_critic_forward.1} parent=0 // pred_region
    _
  $region25: #{vanilla_critic_forward.1} parent=0 // pred_fallthru
    _
  // Predicated region
  $region26: #{vanilla_critic_forward.1} parent=0 // pred_check
    _
  $region27: #{vanilla_critic_forward.1} parent=0 // pred_check_branch
    %696 = sbr.rel (0) target = $region29
  $region28: #{vanilla_critic_forward.1} parent=0 // pred_region
    _
  $region29: #{vanilla_critic_forward.1} parent=0 // pred_fallthru
    _

</llo_original>
